<compile_context>
chip_gen: v7x
topology: tpu7x:2x2x1
jax: 0.10.0
libtpu: 0.0.40
codegen_flags: <defaults>
</compile_context>

<pallas_src>
import functools

import jax
import jax.numpy as jnp
from jax.experimental import pallas as pl
from jax.experimental.pallas import tpu as pltpu


def _dense1_kernel(x_ref, w_ref, o_ref, acc_ref, *, fuse_sigmoid_round):
    k = pl.program_id(1)

    @pl.when(k == 0)
    def _():
        acc_ref[...] = jnp.zeros_like(acc_ref)

    # VPU multiply + XLU lane reduction:
    #   (TB, TK) * (1, TK) --sum over lanes--> (TB, 1), accumulated in f32.
    acc_ref[...] += jnp.sum(
        x_ref[...].astype(jnp.float32) * w_ref[...].astype(jnp.float32),
        axis=-1,
        keepdims=True,
    )

    @pl.when(k == pl.num_programs(1) - 1)
    def _():
        acc = acc_ref[...]
        if fuse_sigmoid_round:
            # torch.round(torch.sigmoid(.)); jnp.round matches round-half-to-even.
            acc = jnp.round(jax.nn.sigmoid(acc))
        o_ref[...] = acc.astype(o_ref.dtype)


def _round_up(v, m):
    return -(-v // m) * m


@functools.partial(jax.jit, static_argnames=("fuse_sigmoid_round",))
def _dense1_pallas(x, w, *, fuse_sigmoid_round):
    """x: (B, D), w: (1, D) (PyTorch Linear weight layout) -> (B, 1)."""
    B, D = x.shape
    assert w.shape == (1, D), f"expected weight shape (1, {D}), got {w.shape}"

    # --- tile-size selection ---------------------------------------------
    MAX_TK = 2048                           # lane-dim tile for K when D is large
    tk = D if D <= MAX_TK else MAX_TK
    target_x_tile_bytes = 4 * 1024 * 1024   # ~4 MiB x tile; ~8 MiB double-buffered
    tb = max(8, (target_x_tile_bytes // (tk * 4)) // 8 * 8)
    tb = min(tb, 1024)                      # amortizes per-step overhead
    tb = min(tb, _round_up(B, 8))           # don't over-tile tiny batches

    Bp = _round_up(B, tb)
    Dp = _round_up(D, tk)

    # Zero-pad so blocks tile exactly; zero K columns add nothing to the sum,
    # padded batch rows are sliced off below.
    if (Bp, Dp) != (B, D):
        x = jnp.pad(x, ((0, Bp - B), (0, Dp - D)))
    if Dp != D:
        w = jnp.pad(w, ((0, 0), (0, Dp - D)))

    grid = (Bp // tb, Dp // tk)

    kernel = functools.partial(_dense1_kernel, fuse_sigmoid_round=fuse_sigmoid_round)

    out = pl.pallas_call(
        kernel,
        out_shape=jax.ShapeDtypeStruct((Bp, 1), x.dtype),
        grid_spec=pltpu.PrefetchScalarGridSpec(
            num_scalar_prefetch=0,
            grid=grid,
            in_specs=[
                # x: tiled over batch and K.
                pl.BlockSpec((tb, tk), lambda i, k: (i, k)),
                # w row: batch-invariant (stays resident), tiled over K only.
                pl.BlockSpec((1, tk), lambda i, k: (0, k)),
            ],
            # Output block index is constant along the K axis -> stays resident
            # as an accumulator target, written back to HBM once per batch tile.
            out_specs=pl.BlockSpec((tb, 1), lambda i, k: (i, 0)),
            scratch_shapes=[pltpu.VMEM((tb, 1), jnp.float32)],
        ),
        compiler_params=pltpu.CompilerParams(
            dimension_semantics=("parallel", "arbitrary"),
            vmem_limit_bytes=32 * 1024 * 1024,
        ),
    )(x, w)

    return out[:B]


def dense1_forward(x, w):
    """Dense1.forward: y = x @ W^T, W of shape (1, D)."""
    return _dense1_pallas(x, w, fuse_sigmoid_round=False)


def dense1_predict(x, w):
    """Dense1.predict: round(sigmoid(forward(x))), epilogue fused in-kernel."""
    return _dense1_pallas(x, w, fuse_sigmoid_round=True)


if __name__ == "__main__":
    key = jax.random.PRNGKey(0)
    kx, kw = jax.random.split(key)

    batch, input_dim = 8, 32

    x = jax.random.normal(kx, (batch, input_dim), dtype=jnp.float32)
    # Deterministic init mimicking nn.Linear default (uniform in +-1/sqrt(fan_in)),
    # stored in the PyTorch weight layout (out_features=1, in_features=D).
    bound = 1.0 / jnp.sqrt(jnp.float32(input_dim))
    w = jax.random.uniform(
        kw, (1, input_dim), dtype=jnp.float32, minval=-bound, maxval=bound
    )

    out = dense1_forward(x, w)
    jax.block_until_ready(out)

    ref = x @ w.T
    assert out.shape == (batch, 1)
    assert jnp.allclose(out, ref, atol=1e-5, rtol=1e-5), "forward mismatch vs reference"

    preds = dense1_predict(x, w)
    jax.block_until_ready(preds)
    ref_preds = jnp.round(jax.nn.sigmoid(ref))
    assert preds.shape == (batch, 1)
    assert jnp.allclose(preds, ref_preds), "predict mismatch vs reference"

    print("KERNEL_OK")
</pallas_src>

<mosaic_0001>
module attributes {stable_mosaic.version = 11 : i64} {
  func.func @_dense1_kernel(%arg0: i32, %arg1: i32, %arg2: memref<8x32xf32, #tpu.memory_space<vmem>>, %arg3: memref<1x32xf32, #tpu.memory_space<vmem>>, %arg4: memref<8x1xf32, #tpu.memory_space<vmem>>, %arg5: memref<8x1xf32, #tpu.memory_space<vmem>>) attributes {dimension_semantics = [#tpu.dimension_semantics<parallel>, #tpu.dimension_semantics<arbitrary>], iteration_bounds = array<i64: 1, 1>, scalar_prefetch = 0 : i64, scratch_operands = 1 : i64, tpu.core_type = #tpu.core_type<tc>, window_params = [{transform_indices = @transform_0, window_bounds = array<i64: 8, 32>}, {transform_indices = @transform_1, window_bounds = array<i64: 1, 32>}, {transform_indices = @transform_2, window_bounds = array<i64: 8, 1>}]} {
    %c0_i32 = arith.constant 0 : i32
    %0 = arith.cmpi eq, %arg1, %c0_i32 : i32
    %1 = arith.extui %0 : i1 to i32
    %c0_i32_0 = arith.constant 0 : i32
    %2 = arith.cmpi ne, %1, %c0_i32_0 : i32
    scf.if %2 {
      %cst_10 = arith.constant 0.000000e+00 : f32
      %15 = vector.broadcast %cst_10 : f32 to vector<8x1xf32>
      %c0_11 = arith.constant 0 : index
      %c0_12 = arith.constant 0 : index
      %16 = vector.load %arg5[%c0_11, %c0_12] : memref<8x1xf32, #tpu.memory_space<vmem>>, vector<8x1xf32>
      tpu.vector_store %arg5[%c0_11, %c0_12], %15 {strides = array<i32>} : memref<8x1xf32, #tpu.memory_space<vmem>>, vector<8x1xf32>,
    } else {
    }
    %c0 = arith.constant 0 : index
    %c0_1 = arith.constant 0 : index
    %3 = vector.load %arg5[%c0, %c0_1] : memref<8x1xf32, #tpu.memory_space<vmem>>, vector<8x1xf32>
    %c0_2 = arith.constant 0 : index
    %c0_3 = arith.constant 0 : index
    %4 = vector.load %arg2[%c0_2, %c0_3] : memref<8x32xf32, #tpu.memory_space<vmem>>, vector<8x32xf32>
    %c0_4 = arith.constant 0 : index
    %c0_5 = arith.constant 0 : index
    %5 = vector.load %arg3[%c0_4, %c0_5] : memref<1x32xf32, #tpu.memory_space<vmem>>, vector<1x32xf32>
    %6 = vector.broadcast %5 : vector<1x32xf32> to vector<8x32xf32>
    %7 = arith.mulf %4, %6 : vector<8x32xf32>
    %cst = arith.constant dense<0.000000e+00> : vector<8xf32>
    %8 = vector.multi_reduction <add>, %7, %cst [1] : vector<8x32xf32> to vector<8xf32>
    %9 = vector.shape_cast %8 : vector<8xf32> to vector<8x1xf32>
    %10 = arith.addf %3, %9 : vector<8x1xf32>
    %c0_6 = arith.constant 0 : index
    %c0_7 = arith.constant 0 : index
    %11 = vector.load %arg5[%c0_6, %c0_7] : memref<8x1xf32, #tpu.memory_space<vmem>>, vector<8x1xf32>
    tpu.vector_store %arg5[%c0_6, %c0_7], %10 {strides = array<i32>} : memref<8x1xf32, #tpu.memory_space<vmem>>, vector<8x1xf32>,
    %c0_i32_8 = arith.constant 0 : i32
    %12 = arith.cmpi eq, %arg1, %c0_i32_8 : i32
    %13 = arith.extui %12 : i1 to i32
    %c0_i32_9 = arith.constant 0 : i32
    %14 = arith.cmpi ne, %13, %c0_i32_9 : i32
    scf.if %14 {
      %c0_10 = arith.constant 0 : index
      %c0_11 = arith.constant 0 : index
      %15 = vector.load %arg5[%c0_10, %c0_11] : memref<8x1xf32, #tpu.memory_space<vmem>>, vector<8x1xf32>
      %c0_12 = arith.constant 0 : index
      %c0_13 = arith.constant 0 : index
      %16 = vector.load %arg4[%c0_12, %c0_13] : memref<8x1xf32, #tpu.memory_space<vmem>>, vector<8x1xf32>
      tpu.vector_store %arg4[%c0_12, %c0_13], %15 {strides = array<i32>} : memref<8x1xf32, #tpu.memory_space<vmem>>, vector<8x1xf32>,
    } else {
    }
    return
  }
  func.func @transform_0(%arg0: i32, %arg1: i32) -> (i32, i32) {
    %c0_i32 = arith.constant 0 : i32
    return %arg0, %arg1 : i32, i32
  }
  func.func @transform_1(%arg0: i32, %arg1: i32) -> (i32, i32) {
    %c0_i32 = arith.constant 0 : i32
    %c0_i32_0 = arith.constant 0 : i32
    return %c0_i32, %arg1 : i32, i32
  }
  func.func @transform_2(%arg0: i32, %arg1: i32) -> (i32, i32) {
    %c0_i32 = arith.constant 0 : i32
    %c0_i32_0 = arith.constant 0 : i32
    return %arg0, %c0_i32 : i32, i32
  }
}

</mosaic_0001>

<llo_original>
// kernel: _dense1_pallas.1
$region0: #{_dense1_pallas.1}
  #allocation0 [shape = 'u32[]', space=smem, size = 0x4, offset = 0x4, fixed_abs, tag = 'smem constant byte address 0x4 - core index']
  #allocation1 [shape = 'u32[144,128]{1,0:T(1,128)}', space=vmem, size = 0x12000, scoped, tag = 'internal scratch']
  #allocation2 [shape = 'f32[8,1]{1,0:T(8,128)}', space=vmem, size = 0x1000, scoped, tag = 'scratch operand']
  %s0 = inlined_call_operand.hbm [shape: f32[8,32], index: 0, kind: input, shape index: {}]
  %s1 = inlined_call_operand.vmem [shape: f32[1,32], index: 1, kind: input, shape index: {}]
  %s2 = inlined_call_operand.vmem [shape: f32[8,1], index: 2, kind: output, shape index: {}]
  %s3 = sld [smem:[#allocation0]]
  $region30: #{_dense1_pallas.1} parent=0
    _
  %s5 = ssub.s32 1, %s3
  %s6 = scalar_select 0, %s5, %s3
  $region1: #{_dense1_pallas.1} parent=0
    #allocation3 [shape = 'u8[4096]{0}', space=vmem, size = 0x1000, scoped, tag = 'input window, operand 0, single buffered']
    #allocation4 [shape = 's32[1]{0}', space=sflag, size = 0x4, scoped, tag = 'scoped memory for _dense1_pallas.1']
    %7 = vsyncpa [#allocation4], 0
    // Predicated region
    $region2: #{_dense1_pallas.1} parent=1 // pred_check
      _
    $region3: #{_dense1_pallas.1} parent=1 // pred_check_branch
      %9 = sbr.rel (0) target = $region5
    $region4: #{_dense1_pallas.1} parent=1 // pred_region
      %s11 = ssub.s32 128, 128
      %12 = vsyncadd [#allocation4], %s11
      %s14 = sshll.u32 [#allocation3], 4
      %s15 = int_to_ptr.vmem [resolvable:$true] %s14
      %17 = dma.hbm_to_vmem [thread:$0]  %s0, 128, %s15, [#allocation4]
    $region5: #{_dense1_pallas.1} parent=1 // pred_fallthru
      _
    // Predicated region
    $region6: #{_dense1_pallas.1} parent=1 // pred_check
      _
    $region7: #{_dense1_pallas.1} parent=1 // pred_check_branch
      %19 = sbr.rel (0) target = $region9
    $region8: #{_dense1_pallas.1} parent=1 // pred_region
      _
    $region9: #{_dense1_pallas.1} parent=1 // pred_fallthru
      _
    // Predicated region
    $region10: #{_dense1_pallas.1} parent=1 // pred_check
      _
    $region11: #{_dense1_pallas.1} parent=1 // pred_check_branch
      %21 = sbr.rel (0) target = $region13
    $region12: #{_dense1_pallas.1} parent=1 // pred_region
      %22 = dma.done [#allocation4], 128
    $region13: #{_dense1_pallas.1} parent=1 // pred_fallthru
      _
    %p23 = scmp.eq.s32.totalorder 0, 0
    // Predicated region
    $region14: #{_dense1_pallas.1} parent=1 // pred_check
      %p24 = pneg %p23
    $region15: #{_dense1_pallas.1} parent=1 // pred_check_branch
      %26 = sbr.rel (%p24) target = $region17
    $region16: #{_dense1_pallas.1} parent=1 // pred_region
      %vm27 = vcmask 7168
      %28 = vst.msk [vmem:[#allocation2] sm:$0xff] %vm27, 0.0
    $region17: #{_dense1_pallas.1} parent=1 // pred_fallthru
      _
    %v29 = vld [vmem:[#allocation2] sm:$0xff]
    %v30 = vld [vmem:[#allocation3] sm:$0xff]
    %v31 = vld [vmem:[%s1] sm:$0x1]
    %v33 = vlaneseq
    %v34 = vshrl.u32 %v33, 7
    %v35 = vsub.s32 0, %v34
    %v36 = vrot.slane %v31, %v35
    %v38 = vmul.f32 %v30, %v36
    %vm39 = vcmask 261120
    %v40 = vsel %vm39, %v38, 0.0
    %41 = vadd.xlane.f32.xlu0 %v40
    %v42 = vpop.xlane.xlu0 %41
    %v43 = vadd.f32 %v29, %v42
    %vm44 = vcmask 7168
    %45 = vst.msk [vmem:[#allocation2] sm:$0xff] %vm44, %v43
    // Predicated region
    $region18: #{_dense1_pallas.1} parent=1 // pred_check
      %p46 = pneg %p23
    $region19: #{_dense1_pallas.1} parent=1 // pred_check_branch
      %48 = sbr.rel (%p46) target = $region21
    $region20: #{_dense1_pallas.1} parent=1 // pred_region
      %v49 = vld [vmem:[#allocation2] sm:$0xff]
      %50 = vst.msk [vmem:[%s2] sm:$0xff] %vm44, %v49
    $region21: #{_dense1_pallas.1} parent=1 // pred_fallthru
      _
    // Predicated region
    $region22: #{_dense1_pallas.1} parent=1 // pred_check
      _
    $region23: #{_dense1_pallas.1} parent=1 // pred_check_branch
      %52 = sbr.rel (0) target = $region25
    $region24: #{_dense1_pallas.1} parent=1 // pred_region
      _
    $region25: #{_dense1_pallas.1} parent=1 // pred_fallthru
      _
    // Predicated region
    $region26: #{_dense1_pallas.1} parent=1 // pred_check
      _
    $region27: #{_dense1_pallas.1} parent=1 // pred_check_branch
      %54 = sbr.rel (0) target = $region29
    $region28: #{_dense1_pallas.1} parent=1 // pred_region
      _
    $region29: #{_dense1_pallas.1} parent=1 // pred_fallthru
      _
    %55 = vsyncpa [#allocation4], 1

</llo_original>
